<compile_context>
chip_gen: v5e
topology: v5e:2x2
jax: 0.10.0
libtpu: 0.0.40
codegen_flags: <defaults>
</compile_context>

<pallas_src>
import functools

import jax
import jax.numpy as jnp
from jax.experimental import pallas as pl
from jax.experimental.pallas import tpu as pltpu


def _round_up(x, m):
    return (x + m - 1) // m * m


def _pad2d(x, rows, cols):
    r, c = x.shape
    return jnp.pad(x, ((0, rows - r), (0, cols - c)))


def graph_conv_kernel(a_ref, h_ref, wrel_ref, wroot_ref, b_ref,
                      out_ref, acc_ref, *, tile_m, tile_k, apply_relu):
    i = pl.program_id(0)
    k = pl.program_id(1)

    @pl.when(k == 0)
    def _():
        acc_ref[...] = jnp.zeros_like(acc_ref)

    # Neighbor aggregation: acc[i_tile] += A[i_tile, k_tile] @ H[k_tile]  (bf16 in, f32 acc).
    koff = pl.multiple_of(k * tile_k, tile_k)
    h_k = h_ref[pl.ds(koff, tile_k), :]
    acc_ref[...] += jnp.dot(a_ref[...], h_k, preferred_element_type=jnp.float32)

    @pl.when(k == pl.num_programs(1) - 1)
    def _():
        ioff = pl.multiple_of(i * tile_m, tile_m)
        h_i = h_ref[pl.ds(ioff, tile_m), :]            # root-term rows from the resident H
        agg = acc_ref[...].astype(jnp.bfloat16)
        out = (jnp.dot(agg, wrel_ref[...], preferred_element_type=jnp.float32)
               + jnp.dot(h_i, wroot_ref[...], preferred_element_type=jnp.float32)
               + b_ref[...])
        if apply_relu:
            out = jnp.maximum(out, 0.0)
        out_ref[...] = out.astype(out_ref.dtype)


def graph_conv_pallas(a, h, w_rel, w_root, b, *, apply_relu, out_dtype,
                      tile_m=128, tile_k=256):
    """One GraphConv layer. a: [Np,Np] bf16, h: [Np,Fin_p] bf16, weights bf16, bias f32."""
    n_pad = a.shape[0]
    f_in = h.shape[1]
    f_out = w_rel.shape[1]
    # Largest K block <= tile_k that divides n_pad (n_pad is always a multiple of 128).
    while n_pad % tile_k:
        tile_k //= 2
    tile_m = min(tile_m, n_pad)
    grid = (n_pad // tile_m, n_pad // tile_k)

    kernel = functools.partial(graph_conv_kernel, tile_m=tile_m, tile_k=tile_k,
                               apply_relu=apply_relu)

    return pl.pallas_call(
        kernel,
        out_shape=jax.ShapeDtypeStruct((n_pad, f_out), out_dtype),
        grid_spec=pltpu.PrefetchScalarGridSpec(
            num_scalar_prefetch=0,
            grid=grid,
            in_specs=[
                pl.BlockSpec((tile_m, tile_k), lambda i, k: (i, k)),  # A tile   (streamed)
                pl.BlockSpec((n_pad, f_in), lambda i, k: (0, 0)),     # H        (resident)
                pl.BlockSpec((f_in, f_out), lambda i, k: (0, 0)),     # W_rel    (resident)
                pl.BlockSpec((f_in, f_out), lambda i, k: (0, 0)),     # W_root   (resident)
                pl.BlockSpec((1, f_out), lambda i, k: (0, 0)),        # bias     (resident)
            ],
            out_specs=pl.BlockSpec((tile_m, f_out), lambda i, k: (i, 0)),
            scratch_shapes=[pltpu.VMEM((tile_m, f_in), jnp.float32)],
        ),
        compiler_params=pltpu.CompilerParams(
            dimension_semantics=("parallel", "arbitrary")),
    )(a, h, w_rel, w_root, b)


def hfgnn_forward(x, edge_index, params, *, tile_m=128, tile_k=256):
    """x: [N, input_dim] f32, edge_index: [2, E] int32, params: dict of weights."""
    n, f_in = x.shape
    hidden = params["w1_rel"].shape[1]
    out_dim = params["w3_rel"].shape[1]

    n_pad = _round_up(n, 128)
    f_in_p = _round_up(f_in, 128)
    hid_p = _round_up(hidden, 128)
    out_p = _round_up(out_dim, 128)

    # Dense padded adjacency (bf16: small integer edge counts are exact up to 256).
    a = jnp.zeros((n_pad, n_pad), jnp.float32).at[edge_index[1], edge_index[0]].add(1.0)
    a = a.astype(jnp.bfloat16)

    h0 = _pad2d(x, n_pad, f_in_p).astype(jnp.bfloat16)

    w1r = _pad2d(params["w1_rel"], f_in_p, hid_p).astype(jnp.bfloat16)
    w1s = _pad2d(params["w1_root"], f_in_p, hid_p).astype(jnp.bfloat16)
    b1 = _pad2d(params["b1"], 1, hid_p)
    w2r = _pad2d(params["w2_rel"], hid_p, hid_p).astype(jnp.bfloat16)
    w2s = _pad2d(params["w2_root"], hid_p, hid_p).astype(jnp.bfloat16)
    b2 = _pad2d(params["b2"], 1, hid_p)
    w3r = _pad2d(params["w3_rel"], hid_p, out_p).astype(jnp.bfloat16)
    w3s = _pad2d(params["w3_root"], hid_p, out_p).astype(jnp.bfloat16)
    b3 = _pad2d(params["b3"], 1, out_p)

    h1 = graph_conv_pallas(a, h0, w1r, w1s, b1, apply_relu=True,
                           out_dtype=jnp.bfloat16, tile_m=tile_m, tile_k=tile_k)
    h2 = graph_conv_pallas(a, h1, w2r, w2s, b2, apply_relu=True,
                           out_dtype=jnp.bfloat16, tile_m=tile_m, tile_k=tile_k)
    h3 = graph_conv_pallas(a, h2, w3r, w3s, b3, apply_relu=False,
                           out_dtype=jnp.float32, tile_m=tile_m, tile_k=tile_k)

    return h3[:n, :out_dim]


def init_params(key, input_dim, hidden_dim, output_dim):
    ks = jax.random.split(key, 9)

    def lin(k, din, dout):
        return jax.random.normal(k, (din, dout), jnp.float32) * 0.1

    return {
        "w1_rel": lin(ks[0], input_dim, hidden_dim),
        "w1_root": lin(ks[1], input_dim, hidden_dim),
        "b1": jax.random.normal(ks[2], (1, hidden_dim), jnp.float32) * 0.1,
        "w2_rel": lin(ks[3], hidden_dim, hidden_dim),
        "w2_root": lin(ks[4], hidden_dim, hidden_dim),
        "b2": jax.random.normal(ks[5], (1, hidden_dim), jnp.float32) * 0.1,
        "w3_rel": lin(ks[6], hidden_dim, output_dim),
        "w3_root": lin(ks[7], hidden_dim, output_dim),
        "b3": jax.random.normal(ks[8], (1, output_dim), jnp.float32) * 0.1,
    }


def hfgnn_reference(x, edge_index, params):
    """Pure-JAX reference mirroring the kernel's padded bf16-in / f32-accumulate numerics."""
    n, f_in = x.shape
    hidden = params["w1_rel"].shape[1]
    out_dim = params["w3_rel"].shape[1]
    n_pad = _round_up(n, 128)
    f_in_p = _round_up(f_in, 128)
    hid_p = _round_up(hidden, 128)
    out_p = _round_up(out_dim, 128)

    a = jnp.zeros((n_pad, n_pad), jnp.float32).at[edge_index[1], edge_index[0]].add(1.0)
    a = a.astype(jnp.bfloat16)
    h = _pad2d(x, n_pad, f_in_p).astype(jnp.bfloat16)

    def layer(h, wr, ws, b, din_p, dout_p, relu, out_dtype):
        wr = _pad2d(wr, din_p, dout_p).astype(jnp.bfloat16)
        ws = _pad2d(ws, din_p, dout_p).astype(jnp.bfloat16)
        b = _pad2d(b, 1, dout_p)
        agg = jnp.dot(a, h, preferred_element_type=jnp.float32).astype(jnp.bfloat16)
        out = (jnp.dot(agg, wr, preferred_element_type=jnp.float32)
               + jnp.dot(h, ws, preferred_element_type=jnp.float32) + b)
        if relu:
            out = jnp.maximum(out, 0.0)
        return out.astype(out_dtype)

    h1 = layer(h, params["w1_rel"], params["w1_root"], params["b1"],
               f_in_p, hid_p, True, jnp.bfloat16)
    h2 = layer(h1, params["w2_rel"], params["w2_root"], params["b2"],
               hid_p, hid_p, True, jnp.bfloat16)
    h3 = layer(h2, params["w3_rel"], params["w3_root"], params["b3"],
               hid_p, out_p, False, jnp.float32)
    return h3[:n, :out_dim]


if __name__ == "__main__":
    key = jax.random.PRNGKey(0)
    k_x, k_e, k_p = jax.random.split(key, 3)

    num_nodes = 512          # padded N -> grid (4, 2): exercises row-parallel + K accumulation
    num_edges = 2048
    input_dim, hidden_dim, output_dim = 16, 32, 8

    x = jax.random.normal(k_x, (num_nodes, input_dim), jnp.float32)
    edge_index = jax.random.randint(k_e, (2, num_edges), 0, num_nodes, jnp.int32)
    params = init_params(k_p, input_dim, hidden_dim, output_dim)

    out = jax.block_until_ready(hfgnn_forward(x, edge_index, params))
    ref = hfgnn_reference(x, edge_index, params)

    assert out.shape == (num_nodes, output_dim)
    assert jnp.allclose(out, ref, atol=5e-2, rtol=5e-2), float(jnp.max(jnp.abs(out - ref)))

    print("KERNEL_OK")
</pallas_src>

<mosaic_0001>
module attributes {stable_mosaic.version = 11 : i64} {
  func.func @graph_conv_kernel(%arg0: i32, %arg1: i32, %arg2: memref<128x256xbf16, #tpu.memory_space<vmem>>, %arg3: memref<512x128xbf16, #tpu.memory_space<vmem>>, %arg4: memref<128x128xbf16, #tpu.memory_space<vmem>>, %arg5: memref<128x128xbf16, #tpu.memory_space<vmem>>, %arg6: memref<1x128xf32, #tpu.memory_space<vmem>>, %arg7: memref<128x128xbf16, #tpu.memory_space<vmem>>, %arg8: memref<128x128xf32, #tpu.memory_space<vmem>>) attributes {dimension_semantics = [#tpu.dimension_semantics<parallel>, #tpu.dimension_semantics<arbitrary>], iteration_bounds = array<i64: 4, 2>, scalar_prefetch = 0 : i64, scratch_operands = 1 : i64, tpu.core_type = #tpu.core_type<tc>, window_params = [{transform_indices = @transform_0, window_bounds = array<i64: 128, 256>}, {pipeline_mode = #tpu.pipeline_mode<synchronous>, transform_indices = @transform_1, window_bounds = array<i64: 512, 128>}, {pipeline_mode = #tpu.pipeline_mode<synchronous>, transform_indices = @transform_2, window_bounds = array<i64: 128, 128>}, {pipeline_mode = #tpu.pipeline_mode<synchronous>, transform_indices = @transform_3, window_bounds = array<i64: 128, 128>}, {pipeline_mode = #tpu.pipeline_mode<synchronous>, transform_indices = @transform_4, window_bounds = array<i64: 1, 128>}, {transform_indices = @transform_5, window_bounds = array<i64: 128, 128>}]} {
    %c0_i32 = arith.constant 0 : i32
    %0 = arith.cmpi eq, %arg1, %c0_i32 : i32
    %1 = arith.extui %0 : i1 to i32
    %c0_i32_0 = arith.constant 0 : i32
    %2 = arith.cmpi ne, %1, %c0_i32_0 : i32
    scf.if %2 {
      %cst_8 = arith.constant 0.000000e+00 : f32
      %15 = vector.broadcast %cst_8 : f32 to vector<128x128xf32>
      %c0_9 = arith.constant 0 : index
      %c0_10 = arith.constant 0 : index
      %16 = vector.load %arg8[%c0_9, %c0_10] : memref<128x128xf32, #tpu.memory_space<vmem>>, vector<128x128xf32>
      tpu.vector_store %arg8[%c0_9, %c0_10], %15 {strides = array<i32>} : memref<128x128xf32, #tpu.memory_space<vmem>>, vector<128x128xf32>,
    } else {
    }
    %c256_i32 = arith.constant 256 : i32
    %3 = arith.muli %arg1, %c256_i32 : i32
    %4 = tpu.assume_multiple %3, 256 : i32
    %5 = arith.index_cast %4 : i32 to index
    %c0 = arith.constant 0 : index
    %6 = vector.load %arg3[%5, %c0] : memref<512x128xbf16, #tpu.memory_space<vmem>>, vector<256x128xbf16>
    %c0_1 = arith.constant 0 : index
    %c0_2 = arith.constant 0 : index
    %7 = vector.load %arg8[%c0_1, %c0_2] : memref<128x128xf32, #tpu.memory_space<vmem>>, vector<128x128xf32>
    %c0_3 = arith.constant 0 : index
    %c0_4 = arith.constant 0 : index
    %8 = vector.load %arg2[%c0_3, %c0_4] : memref<128x256xbf16, #tpu.memory_space<vmem>>, vector<128x256xbf16>
    %cst = arith.constant dense<0.000000e+00> : vector<128x128xf32>
    %9 = tpu.matmul %8, %6, %cst {dimension_numbers = #tpu.dot_dimension_numbers<[1], [0], [0], [1], [0, 0, 1, 1], [], []>} : vector<128x256xbf16>, vector<256x128xbf16>, vector<128x128xf32> -> vector<128x128xf32>
    %10 = arith.addf %7, %9 : vector<128x128xf32>
    %c0_5 = arith.constant 0 : index
    %c0_6 = arith.constant 0 : index
    %11 = vector.load %arg8[%c0_5, %c0_6] : memref<128x128xf32, #tpu.memory_space<vmem>>, vector<128x128xf32>
    tpu.vector_store %arg8[%c0_5, %c0_6], %10 {strides = array<i32>} : memref<128x128xf32, #tpu.memory_space<vmem>>, vector<128x128xf32>,
    %c1_i32 = arith.constant 1 : i32
    %12 = arith.cmpi eq, %arg1, %c1_i32 : i32
    %13 = arith.extui %12 : i1 to i32
    %c0_i32_7 = arith.constant 0 : i32
    %14 = arith.cmpi ne, %13, %c0_i32_7 : i32
    scf.if %14 {
      %c128_i32 = arith.constant 128 : i32
      %15 = arith.muli %arg0, %c128_i32 : i32
      %16 = tpu.assume_multiple %15, 128 : i32
      %17 = arith.index_cast %16 : i32 to index
      %c0_8 = arith.constant 0 : index
      %18 = vector.load %arg3[%17, %c0_8] : memref<512x128xbf16, #tpu.memory_space<vmem>>, vector<128x128xbf16>
      %c0_9 = arith.constant 0 : index
      %c0_10 = arith.constant 0 : index
      %19 = vector.load %arg8[%c0_9, %c0_10] : memref<128x128xf32, #tpu.memory_space<vmem>>, vector<128x128xf32>
      %20 = arith.truncf %19 : vector<128x128xf32> to vector<128x128xbf16>
      %c0_11 = arith.constant 0 : index
      %c0_12 = arith.constant 0 : index
      %21 = vector.load %arg4[%c0_11, %c0_12] : memref<128x128xbf16, #tpu.memory_space<vmem>>, vector<128x128xbf16>
      %cst_13 = arith.constant dense<0.000000e+00> : vector<128x128xf32>
      %22 = tpu.matmul %20, %21, %cst_13 {dimension_numbers = #tpu.dot_dimension_numbers<[1], [0], [0], [1], [0, 0, 1, 1], [], []>} : vector<128x128xbf16>, vector<128x128xbf16>, vector<128x128xf32> -> vector<128x128xf32>
      %c0_14 = arith.constant 0 : index
      %c0_15 = arith.constant 0 : index
      %23 = vector.load %arg5[%c0_14, %c0_15] : memref<128x128xbf16, #tpu.memory_space<vmem>>, vector<128x128xbf16>
      %cst_16 = arith.constant dense<0.000000e+00> : vector<128x128xf32>
      %24 = tpu.matmul %18, %23, %cst_16 {dimension_numbers = #tpu.dot_dimension_numbers<[1], [0], [0], [1], [0, 0, 1, 1], [], []>} : vector<128x128xbf16>, vector<128x128xbf16>, vector<128x128xf32> -> vector<128x128xf32>
      %25 = arith.addf %22, %24 : vector<128x128xf32>
      %c0_17 = arith.constant 0 : index
      %c0_18 = arith.constant 0 : index
      %26 = vector.load %arg6[%c0_17, %c0_18] : memref<1x128xf32, #tpu.memory_space<vmem>>, vector<1x128xf32>
      %27 = vector.broadcast %26 : vector<1x128xf32> to vector<128x128xf32>
      %28 = arith.addf %25, %27 : vector<128x128xf32>
      %cst_19 = arith.constant 0.000000e+00 : f32
      %29 = vector.broadcast %cst_19 : f32 to vector<128x128xf32>
      %30 = arith.maximumf %28, %29 : vector<128x128xf32>
      %31 = arith.truncf %30 : vector<128x128xf32> to vector<128x128xbf16>
      %c0_20 = arith.constant 0 : index
      %c0_21 = arith.constant 0 : index
      %32 = vector.load %arg7[%c0_20, %c0_21] : memref<128x128xbf16, #tpu.memory_space<vmem>>, vector<128x128xbf16>
      tpu.vector_store %arg7[%c0_20, %c0_21], %31 {strides = array<i32>} : memref<128x128xbf16, #tpu.memory_space<vmem>>, vector<128x128xbf16>,
    } else {
    }
    return
  }
  func.func @transform_0(%arg0: i32, %arg1: i32) -> (i32, i32) {
    %c0_i32 = arith.constant 0 : i32
    return %arg0, %arg1 : i32, i32
  }
  func.func @transform_1(%arg0: i32, %arg1: i32) -> (i32, i32) {
    %c0_i32 = arith.constant 0 : i32
    %c0_i32_0 = arith.constant 0 : i32
    %c0_i32_1 = arith.constant 0 : i32
    return %c0_i32, %c0_i32_0 : i32, i32
  }
  func.func @transform_2(%arg0: i32, %arg1: i32) -> (i32, i32) {
    %c0_i32 = arith.constant 0 : i32
    %c0_i32_0 = arith.constant 0 : i32
    %c0_i32_1 = arith.constant 0 : i32
    return %c0_i32, %c0_i32_0 : i32, i32
  }
  func.func @transform_3(%arg0: i32, %arg1: i32) -> (i32, i32) {
    %c0_i32 = arith.constant 0 : i32
    %c0_i32_0 = arith.constant 0 : i32
    %c0_i32_1 = arith.constant 0 : i32
    return %c0_i32, %c0_i32_0 : i32, i32
  }
  func.func @transform_4(%arg0: i32, %arg1: i32) -> (i32, i32) {
    %c0_i32 = arith.constant 0 : i32
    %c0_i32_0 = arith.constant 0 : i32
    %c0_i32_1 = arith.constant 0 : i32
    return %c0_i32, %c0_i32_0 : i32, i32
  }
  func.func @transform_5(%arg0: i32, %arg1: i32) -> (i32, i32) {
    %c0_i32 = arith.constant 0 : i32
    %c0_i32_0 = arith.constant 0 : i32
    return %arg0, %c0_i32 : i32, i32
  }
}

</mosaic_0001>

<llo_original>
// kernel: tpu_custom_call.1
$region0: #{tpu_custom_call.1}
  #allocation0 [shape = 'u32[]', space=smem, size = 0x4, offset = 0x4, fixed_abs, tag = 'smem constant byte address 0x4 - core index']
  #allocation1 [shape = 'u32[72,128]{1,0:T(1,128)}', space=vmem, size = 0x9000, scoped, tag = 'internal scratch']
  #allocation2 [shape = 'f32[128,128]{1,0:T(8,128)}', space=vmem, size = 0x10000, scoped, tag = 'scratch operand']
  %s0 = inlined_call_operand.hbm [shape: bf16[512,512], index: 0, kind: input, shape index: {}]
  %s1 = inlined_call_operand.hbm [shape: bf16[512,128], index: 1, kind: input, shape index: {}]
  %s2 = inlined_call_operand.hbm [shape: bf16[128,128], index: 2, kind: input, shape index: {}]
  %s3 = inlined_call_operand.hbm [shape: bf16[128,128], index: 3, kind: input, shape index: {}]
  %s4 = inlined_call_operand.vmem [shape: f32[1,128], index: 4, kind: input, shape index: {}]
  %s5 = inlined_call_operand.hbm [shape: bf16[512,128], index: 5, kind: output, shape index: {}]
  %s6 = sld [smem:[#allocation0]]
  $region77: #{tpu_custom_call.1} parent=0
    _
  %s8 = ssub.s32 1, %s6
  %s9 = scalar_select 0, %s8, %s6
  $region1: #{tpu_custom_call.1} parent=0
    #allocation3 [shape = 'u8[131072]{0}', space=vmem, size = 0x20000, scoped, tag = 'input window, operand 0']
    #allocation4 [shape = 's32[2]{0}', space=sflag, size = 0x8, scoped, tag = 'scoped memory for tpu_custom_call.1']
    #allocation5 [shape = 's32[2]{0}', space=sflag, size = 0x8, scoped, tag = 'scoped memory for tpu_custom_call.1']
    #allocation6 [shape = 'u8[131072]{0}', space=vmem, size = 0x20000, scoped, tag = 'input window, operand 1, single buffered']
    #allocation7 [shape = 's32[1]{0}', space=sflag, size = 0x4, scoped, tag = 'scoped memory for tpu_custom_call.1']
    #allocation8 [shape = 'u8[32768]{0}', space=vmem, size = 0x8000, scoped, tag = 'input window, operand 2, single buffered']
    #allocation9 [shape = 'u8[32768]{0}', space=vmem, size = 0x8000, scoped, tag = 'input window, operand 3, single buffered']
    #allocation10 [shape = 's32[1]{0}', space=sflag, size = 0x4, scoped, tag = 'scoped memory for tpu_custom_call.1']
    #allocation11 [shape = 'u8[65536]{0}', space=vmem, size = 0x10000, scoped, tag = 'output window, operand 0']
    %10 = vsyncpa [#allocation4], 0
    %s11 = scalar_lea.sflag [#allocation4], 1
    %12 = vsyncpa %s11, 0
    %13 = vsyncpa [#allocation7], 0
    %14 = vsyncpa [#allocation10], 0
    %15 = vsyncpa [#allocation5], 0
    %s16 = scalar_lea.sflag [#allocation5], 1
    %17 = vsyncpa %s16, 0
    loop: start=0, step=1, limit=10
    $region2: #{tpu_custom_call.1} parent=1 // loop_pre_header
      _
    $region3: #{tpu_custom_call.1} parent=1 // loop_header
      %s19 = sphi 0, %s23
      %p20 = scmp.ge.s32.totalorder %s19, 10
      %s26 = sphi 0, %s38
      %s27 = sphi 0, %s34
      %s28 = sphi 0, %s26
      %s29 = sphi 0, %s27
      %s30 = sphi 0, %s28
      %s31 = sphi 0, %s29
      %s43 = sphi 0, %s45
      %s46 = sphi 0, %s43
      %s47 = sphi 0, %s46
      %s63 = sphi 0, %s47
      %s67 = sphi 0, %s67
      %s69 = sphi 0, %s67
      %s70 = sphi 0, %s69
      %s84 = sphi 0, %s70
      %s88 = sphi 0, %s88
      %s90 = sphi 0, %s88
      %s91 = sphi 0, %s90
      %s105 = sphi 0, %s91
      %s109 = sphi 0, %s109
      %s111 = sphi 0, %s109
      %s112 = sphi 0, %s111
      %s126 = sphi 0, %s112
      %s130 = sphi 0, %s130
      %s132 = sphi 0, %s130
      %s133 = sphi 0, %s132
      %s147 = sphi 0, %s133
      %s153 = sphi 0, %s155
      %s156 = sphi 0, %s153
      %s157 = sphi 0, %s156
      %s173 = sphi 0, %s157
    $region4: #{tpu_custom_call.1} parent=1 // loop_header_branch
      %22 = sbr.rel (%p20) target = $region8
    $region5: #{tpu_custom_call.1} parent=1 // loop_body
      %s24 = ssub.s32 %s19, 1
      %s25 = ssub.s32 %s19, 2
      %s32 = sadd.s32 1, %s27
      %p33 = scmp.ge.s32.totalorder %s32, 2
      %s34 = scalar_select %p33, 0, %s32
      %s35 = sadd.s32 1, %s26
      %s36 = scalar_select %p33, %s35, %s26
      %p37 = scmp.ge.s32.totalorder %s36, 4
      %s38 = scalar_select %p37, 0, %s36
      %s39 = ssub.s32 %s26, %s38
      %s40 = ssub.s32 %s27, %s34
      %s41 = sor.u32 %s39, %s40
      %p42 = scmp.eq.s32.totalorder %s41, 0
      %s44 = sadd.s32 %s43, 1
      %s45 = scalar_select %p42, %s43, %s44
      %p48 = pneg %p42
      %p49 = scmp.eq.s32.totalorder %s19, 7
      %p50 = por %p48, %p49
      %p51 = scmp.ne.s32.totalorder %s43, %s46
      %p52 = scmp.eq.s32.totalorder %s19, 0
      %p53 = por %p51, %p52
      %p54 = scmp.ne.s32.totalorder %s43, %s46
      %p55 = scmp.eq.s32.totalorder %s24, 7
      %p56 = por %p54, %p55
      %p57 = scmp.ne.s32.totalorder %s46, %s47
      %p58 = scmp.eq.s32.totalorder %s24, 0
      %p59 = por %p57, %p58
      %p60 = scmp.ne.s32.totalorder %s46, %s47
      %p61 = scmp.eq.s32.totalorder %s25, 7
      %p62 = por %p60, %p61
      %p64 = scmp.ne.s32.totalorder %s47, %s63
      %p65 = scmp.eq.s32.totalorder %s25, 0
      %p66 = por %p64, %p65
      %s68 = sadd.s32 %s67, 1
      %p71 = scmp.eq.s32.totalorder %s19, 7
      %p72 = scmp.ne.s32.totalorder %s67, %s69
      %p73 = scmp.eq.s32.totalorder %s19, 0
      %p74 = por %p72, %p73
      %p75 = scmp.ne.s32.totalorder %s67, %s69
      %p76 = scmp.eq.s32.totalorder %s24, 7
      %p77 = por %p75, %p76
      %p78 = scmp.ne.s32.totalorder %s69, %s70
      %p79 = scmp.eq.s32.totalorder %s24, 0
      %p80 = por %p78, %p79
      %p81 = scmp.ne.s32.totalorder %s69, %s70
      %p82 = scmp.eq.s32.totalorder %s25, 7
      %p83 = por %p81, %p82
      %p85 = scmp.ne.s32.totalorder %s70, %s84
      %p86 = scmp.eq.s32.totalorder %s25, 0
      %p87 = por %p85, %p86
      %s89 = sadd.s32 %s88, 1
      %p92 = scmp.eq.s32.totalorder %s19, 7
      %p93 = scmp.ne.s32.totalorder %s88, %s90
      %p94 = scmp.eq.s32.totalorder %s19, 0
      %p95 = por %p93, %p94
      %p96 = scmp.ne.s32.totalorder %s88, %s90
      %p97 = scmp.eq.s32.totalorder %s24, 7
      %p98 = por %p96, %p97
      %p99 = scmp.ne.s32.totalorder %s90, %s91
      %p100 = scmp.eq.s32.totalorder %s24, 0
      %p101 = por %p99, %p100
      %p102 = scmp.ne.s32.totalorder %s90, %s91
      %p103 = scmp.eq.s32.totalorder %s25, 7
      %p104 = por %p102, %p103
      %p106 = scmp.ne.s32.totalorder %s91, %s105
      %p107 = scmp.eq.s32.totalorder %s25, 0
      %p108 = por %p106, %p107
      %s110 = sadd.s32 %s109, 1
      %p113 = scmp.eq.s32.totalorder %s19, 7
      %p114 = scmp.ne.s32.totalorder %s109, %s111
      %p115 = scmp.eq.s32.totalorder %s19, 0
      %p116 = por %p114, %p115
      %p117 = scmp.ne.s32.totalorder %s109, %s111
      %p118 = scmp.eq.s32.totalorder %s24, 7
      %p119 = por %p117, %p118
      %p120 = scmp.ne.s32.totalorder %s111, %s112
      %p121 = scmp.eq.s32.totalorder %s24, 0
      %p122 = por %p120, %p121
      %p123 = scmp.ne.s32.totalorder %s111, %s112
      %p124 = scmp.eq.s32.totalorder %s25, 7
      %p125 = por %p123, %p124
      %p127 = scmp.ne.s32.totalorder %s112, %s126
      %p128 = scmp.eq.s32.totalorder %s25, 0
      %p129 = por %p127, %p128
      %s131 = sadd.s32 %s130, 1
      %p134 = scmp.eq.s32.totalorder %s19, 7
      %p135 = scmp.ne.s32.totalorder %s130, %s132
      %p136 = scmp.eq.s32.totalorder %s19, 0
      %p137 = por %p135, %p136
      %p138 = scmp.ne.s32.totalorder %s130, %s132
      %p139 = scmp.eq.s32.totalorder %s24, 7
      %p140 = por %p138, %p139
      %p141 = scmp.ne.s32.totalorder %s132, %s133
      %p142 = scmp.eq.s32.totalorder %s24, 0
      %p143 = por %p141, %p142
      %p144 = scmp.ne.s32.totalorder %s132, %s133
      %p145 = scmp.eq.s32.totalorder %s25, 7
      %p146 = por %p144, %p145
      %p148 = scmp.ne.s32.totalorder %s133, %s147
      %p149 = scmp.eq.s32.totalorder %s25, 0
      %p150 = por %p148, %p149
      %s151 = ssub.s32 %s26, %s38
      %p152 = scmp.eq.s32.totalorder %s151, 0
      %s154 = sadd.s32 %s153, 1
      %s155 = scalar_select %p152, %s153, %s154
      %p158 = pneg %p152
      %p159 = scmp.eq.s32.totalorder %s19, 7
      %p160 = por %p158, %p159
      %p161 = scmp.ne.s32.totalorder %s153, %s156
      %p162 = scmp.eq.s32.totalorder %s19, 0
      %p163 = por %p161, %p162
      %p164 = scmp.ne.s32.totalorder %s153, %s156
      %p165 = scmp.eq.s32.totalorder %s24, 7
      %p166 = por %p164, %p165
      %p167 = scmp.ne.s32.totalorder %s156, %s157
      %p168 = scmp.eq.s32.totalorder %s24, 0
      %p169 = por %p167, %p168
      %p170 = scmp.ne.s32.totalorder %s156, %s157
      %p171 = scmp.eq.s32.totalorder %s25, 7
      %p172 = por %p170, %p171
      %p174 = scmp.ne.s32.totalorder %s157, %s173
      %p175 = scmp.eq.s32.totalorder %s25, 0
      %p176 = por %p174, %p175
      %p177 = scmp.le.s32.totalorder 1, %s19
      %p178 = scmp.lt.s32.totalorder %s19, 9
      %p179 = pnand %p177, %p178
      %p180 = pneg %p179
      // Predicated region
      $region9: #{tpu_custom_call.1} parent=5 // pred_check
        _
      $region10: #{tpu_custom_call.1} parent=5 // pred_check_branch
        %182 = sbr.rel (%p179) target = $region12
      $region11: #{tpu_custom_call.1} parent=5 // pred_region
        %s183 = ssub.s32 %s19, 1
        // Predicated region
        $region13: #{tpu_custom_call.1} parent=11 // pred_check
          %p184 = pneg %p80
        $region14: #{tpu_custom_call.1} parent=11 // pred_check_branch
          %186 = sbr.rel (%p184) target = $region16
        $region15: #{tpu_custom_call.1} parent=11 // pred_region
          %188 = vsyncadd [#allocation7], 0
          %s189 = sshll.u32 %s1, 4
          %s190 = int_to_ptr.hbm [resolvable:$true] %s189
          %s191 = sshll.u32 [#allocation6], 4
          %s192 = int_to_ptr.vmem [resolvable:$true] %s191
          %197 = dma.hbm_to_vmem [thread:$0]  %s190, 4096, %s192, [#allocation7], 64, 64, 4
        $region16: #{tpu_custom_call.1} parent=11 // pred_fallthru
          _
        // Predicated region
        $region17: #{tpu_custom_call.1} parent=11 // pred_check
          %p198 = pneg %p101
        $region18: #{tpu_custom_call.1} parent=11 // pred_check_branch
          %200 = sbr.rel (%p198) target = $region20
        $region19: #{tpu_custom_call.1} parent=11 // pred_region
          %202 = vsyncadd [#allocation7], 0
          %s203 = sshll.u32 %s2, 4
          %s204 = int_to_ptr.hbm [resolvable:$true] %s203
          %s205 = sshll.u32 [#allocation8], 4
          %s206 = int_to_ptr.vmem [resolvable:$true] %s205
          %211 = dma.hbm_to_vmem [thread:$0]  %s204, 1024, %s206, [#allocation7], 64, 64, 4
        $region20: #{tpu_custom_call.1} parent=11 // pred_fallthru
          _
        // Predicated region
        $region21: #{tpu_custom_call.1} parent=11 // pred_check
          %p212 = pneg %p122
        $region22: #{tpu_custom_call.1} parent=11 // pred_check_branch
          %214 = sbr.rel (%p212) target = $region24
        $region23: #{tpu_custom_call.1} parent=11 // pred_region
          %216 = vsyncadd [#allocation10], 0
          %s217 = sshll.u32 %s3, 4
          %s218 = int_to_ptr.hbm [resolvable:$true] %s217
          %s219 = sshll.u32 [#allocation9], 4
          %s220 = int_to_ptr.vmem [resolvable:$true] %s219
          %225 = dma.hbm_to_vmem [thread:$0]  %s218, 1024, %s220, [#allocation10], 64, 64, 4
        $region24: #{tpu_custom_call.1} parent=11 // pred_fallthru
          _
        // Predicated region
        $region25: #{tpu_custom_call.1} parent=11 // pred_check
          %p226 = pneg %p143
        $region26: #{tpu_custom_call.1} parent=11 // pred_check_branch
          %228 = sbr.rel (%p226) target = $region28
        $region27: #{tpu_custom_call.1} parent=11 // pred_region
          _
        $region28: #{tpu_custom_call.1} parent=11 // pred_fallthru
          _
      $region12: #{tpu_custom_call.1} parent=5 // pred_fallthru
        _
      %p229 = scmp.lt.s32.totalorder %s19, 8
      // Predicated region
      $region29: #{tpu_custom_call.1} parent=5 // pred_check
        %p230 = pneg %p229
      $region30: #{tpu_custom_call.1} parent=5 // pred_check_branch
        %232 = sbr.rel (%p230) target = $region32
      $region31: #{tpu_custom_call.1} parent=5 // pred_region
        // Predicated region
        $region33: #{tpu_custom_call.1} parent=31 // pred_check
          %p233 = pneg %p53
        $region34: #{tpu_custom_call.1} parent=31 // pred_check_branch
          %235 = sbr.rel (%p233) target = $region36
        $region35: #{tpu_custom_call.1} parent=31 // pred_region
          %s236 = sand.u32 %s43, 1
          %s237 = scalar_lea.sflag [#allocation4], %s236
          %s238 = sand.u32 %s43, 1
          %s239 = smul.addr %s238, 128
          %s240 = scalar_lea.vmem [#allocation3], %s239
          %s241 = smul.u32 16, %s26
          %s242 = smul.u32 2, %s27
          %244 = vsyncadd %s237, 0
          %s245 = smul.addr %s241, 4
          %s246 = sadd.s32 %s242, %s245
          %s247 = smul.addr %s246, 4
          %s248 = scalar_lea.hbm %s0, %s247
          %s249 = sshll.u32 %s248, 4
          %s250 = int_to_ptr.hbm [resolvable:$true] %s249
          %s251 = sshll.u32 %s240, 4
          %s252 = int_to_ptr.vmem [resolvable:$true] %s251
          %257 = dma.hbm_to_vmem [thread:$0]  %s250, 2048, %s252, %s237, 256, 128, 8
        $region36: #{tpu_custom_call.1} parent=31 // pred_fallthru
          _
      $region32: #{tpu_custom_call.1} parent=5 // pred_fallthru
        _
      %p258 = scmp.le.s32.totalorder 1, %s19
      %p259 = scmp.lt.s32.totalorder %s19, 9
      %p260 = pnand %p258, %p259
      %p261 = pneg %p260
      // Predicated region
      $region37: #{tpu_custom_call.1} parent=5 // pred_check
        _
      $region38: #{tpu_custom_call.1} parent=5 // pred_check_branch
        %263 = sbr.rel (%p260) target = $region40
      $region39: #{tpu_custom_call.1} parent=5 // pred_region
        %s264 = ssub.s32 %s19, 1
        %s265 = sand.u32 %s46, 1
        %s266 = scalar_lea.sflag [#allocation4], %s265
        %s267 = sand.u32 %s46, 1
        %s268 = smul.addr %s267, 128
        %s269 = scalar_lea.vmem [#allocation3], %s268
        // Predicated region
        $region41: #{tpu_custom_call.1} parent=39 // pred_check
          %p270 = pneg %p59
        $region42: #{tpu_custom_call.1} parent=39 // pred_check_branch
          %272 = sbr.rel (%p270) target = $region44
        $region43: #{tpu_custom_call.1} parent=39 // pred_region
          %274 = dma.done %s266, 2048
        $region44: #{tpu_custom_call.1} parent=39 // pred_fallthru
          _
        // Predicated region
        $region45: #{tpu_custom_call.1} parent=39 // pred_check
          %p275 = pneg %p80
        $region46: #{tpu_custom_call.1} parent=39 // pred_check_branch
          %277 = sbr.rel (%p275) target = $region48
        $region47: #{tpu_custom_call.1} parent=39 // pred_region
          %279 = dma.done [#allocation7], 4096
        $region48: #{tpu_custom_call.1} parent=39 // pred_fallthru
          _
        // Predicated region
        $region49: #{tpu_custom_call.1} parent=39 // pred_check
          %p280 = pneg %p101
        $region50: #{tpu_custom_call.1} parent=39 // pred_check_branch
          %282 = sbr.rel (%p280) target = $region52
        $region51: #{tpu_custom_call.1} parent=39 // pred_region
          %284 = dma.done [#allocation7], 1024
        $region52: #{tpu_custom_call.1} parent=39 // pred_fallthru
          _
        // Predicated region
        $region53: #{tpu_custom_call.1} parent=39 // pred_check
          %p285 = pneg %p122
        $region54: #{tpu_custom_call.1} parent=39 // pred_check_branch
          %287 = sbr.rel (%p285) target = $region56
        $region55: #{tpu_custom_call.1} parent=39 // pred_region
          %289 = dma.done [#allocation10], 1024
        $region56: #{tpu_custom_call.1} parent=39 // pred_fallthru
          _
        %s290 = sand.u32 %s46, 1
        %s291 = scalar_lea.sflag [#allocation4], %s290
        %s292 = sand.u32 %s46, 1
        %s293 = smul.addr %s292, 128
        %s294 = scalar_lea.vmem [#allocation3], %s293
        %p295 = pneg %p59
        %p296 = pneg %p56
        %p297 = pneg %p80
        %p298 = pneg %p77
        %p299 = pneg %p101
        %p300 = pneg %p98
        %p301 = pneg %p122
        %p302 = pneg %p119
        %p303 = pneg %p143
        %p304 = pneg %p140
        %p305 = pneg %p169
        %p306 = pneg %p166
        %s307 = sand.u32 %s156, 1
        %s308 = scalar_lea.sflag [#allocation5], %s307
        %s309 = sand.u32 %s156, 1
        %s310 = smul.addr %s309, 64
        %s311 = scalar_lea.vmem [#allocation11], %s310
        %s312 = smul.u32 16, %s28
        %s313 = smul.u32 2, %s29
        %s314 = smul.u32 16, %s28
        %p315 = scmp.eq.s32.totalorder %s29, 0
        // Predicated region
        $region57: #{tpu_custom_call.1} parent=39 // pred_check
          %p316 = pneg %p315
        $region58: #{tpu_custom_call.1} parent=39 // pred_check_branch
          %318 = sbr.rel (%p316) target = $region60
        $region59: #{tpu_custom_call.1} parent=39 // pred_region
          %319 = vst [vmem:[#allocation2] sm:$0xff] 0.0
          %320 = vst [vmem:[#allocation2 + $0x8] sm:$0xff] 0.0
          %321 = vst [vmem:[#allocation2 + $0x10] sm:$0xff] 0.0
          %322 = vst [vmem:[#allocation2 + $0x18] sm:$0xff] 0.0
          %323 = vst [vmem:[#allocation2 + $0x20] sm:$0xff] 0.0
          %324 = vst [vmem:[#allocation2 + $0x28] sm:$0xff] 0.0
          %325 = vst [vmem:[#allocation2 + $0x30] sm:$0xff] 0.0
          %326 = vst [vmem:[#allocation2 + $0x38] sm:$0xff] 0.0
          %327 = vst [vmem:[#allocation2 + $0x40] sm:$0xff] 0.0
          %328 = vst [vmem:[#allocation2 + $0x48] sm:$0xff] 0.0
          %329 = vst [vmem:[#allocation2 + $0x50] sm:$0xff] 0.0
          %330 = vst [vmem:[#allocation2 + $0x58] sm:$0xff] 0.0
          %331 = vst [vmem:[#allocation2 + $0x60] sm:$0xff] 0.0
          %332 = vst [vmem:[#allocation2 + $0x68] sm:$0xff] 0.0
          %333 = vst [vmem:[#allocation2 + $0x70] sm:$0xff] 0.0
          %334 = vst [vmem:[#allocation2 + $0x78] sm:$0xff] 0.0
        $region60: #{tpu_custom_call.1} parent=39 // pred_fallthru
          _
        %s335 = smul.u32 %s29, 256
        %s336 = sshra.s32 %s335, 3
        %s337 = sand.u32 %s335, 7
        %s338 = smul.addr %s336, 4
        %s339 = scalar_lea.vmem [#allocation6], %s338
        %v340 = vld [vmem:[%s339] sm:$0xf]
        %v341 = vld [vmem:[%s339 + $0x4] sm:$0xf]
        %v342 = vld [vmem:[%s339 + $0x8] sm:$0xf]
        %v343 = vld [vmem:[%s339 + $0xc] sm:$0xf]
        %v344 = vld [vmem:[%s339 + $0x10] sm:$0xf]
        %v345 = vld [vmem:[%s339 + $0x14] sm:$0xf]
        %v346 = vld [vmem:[%s339 + $0x18] sm:$0xf]
        %v347 = vld [vmem:[%s339 + $0x1c] sm:$0xf]
        %v348 = vld [vmem:[%s339 + $0x20] sm:$0xf]
        %v349 = vld [vmem:[%s339 + $0x24] sm:$0xf]
        %v350 = vld [vmem:[%s339 + $0x28] sm:$0xf]
        %v351 = vld [vmem:[%s339 + $0x2c] sm:$0xf]
        %v352 = vld [vmem:[%s339 + $0x30] sm:$0xf]
        %v353 = vld [vmem:[%s339 + $0x34] sm:$0xf]
        %v354 = vld [vmem:[%s339 + $0x38] sm:$0xf]
        %v355 = vld [vmem:[%s339 + $0x3c] sm:$0xf]
        %v356 = vld [vmem:[%s339 + $0x40] sm:$0xf]
        %v357 = vld [vmem:[%s339 + $0x44] sm:$0xf]
        %v358 = vld [vmem:[%s339 + $0x48] sm:$0xf]
        %v359 = vld [vmem:[%s339 + $0x4c] sm:$0xf]
        %v360 = vld [vmem:[%s339 + $0x50] sm:$0xf]
        %v361 = vld [vmem:[%s339 + $0x54] sm:$0xf]
        %v362 = vld [vmem:[%s339 + $0x58] sm:$0xf]
        %v363 = vld [vmem:[%s339 + $0x5c] sm:$0xf]
        %v364 = vld [vmem:[%s339 + $0x60] sm:$0xf]
        %v365 = vld [vmem:[%s339 + $0x64] sm:$0xf]
        %v366 = vld [vmem:[%s339 + $0x68] sm:$0xf]
        %v367 = vld [vmem:[%s339 + $0x6c] sm:$0xf]
        %v368 = vld [vmem:[%s339 + $0x70] sm:$0xf]
        %v369 = vld [vmem:[%s339 + $0x74] sm:$0xf]
        %v370 = vld [vmem:[%s339 + $0x78] sm:$0xf]
        %v371 = vld [vmem:[%s339 + $0x7c] sm:$0xf]
        %v372 = vld [vmem:[#allocation2] sm:$0xff]
        %v373 = vld [vmem:[#allocation2 + $0x8] sm:$0xff]
        %v374 = vld [vmem:[#allocation2 + $0x10] sm:$0xff]
        %v375 = vld [vmem:[#allocation2 + $0x18] sm:$0xff]
        %v376 = vld [vmem:[#allocation2 + $0x20] sm:$0xff]
        %v377 = vld [vmem:[#allocation2 + $0x28] sm:$0xff]
        %v378 = vld [vmem:[#allocation2 + $0x30] sm:$0xff]
        %v379 = vld [vmem:[#allocation2 + $0x38] sm:$0xff]
        %v380 = vld [vmem:[#allocation2 + $0x40] sm:$0xff]
        %v381 = vld [vmem:[#allocation2 + $0x48] sm:$0xff]
        %v382 = vld [vmem:[#allocation2 + $0x50] sm:$0xff]
        %v383 = vld [vmem:[#allocation2 + $0x58] sm:$0xff]
        %v384 = vld [vmem:[#allocation2 + $0x60] sm:$0xff]
        %v385 = vld [vmem:[#allocation2 + $0x68] sm:$0xff]
        %v386 = vld [vmem:[#allocation2 + $0x70] sm:$0xff]
        %v387 = vld [vmem:[#allocation2 + $0x78] sm:$0xff]
        %v388 = vld [vmem:[%s269] sm:$0xff]
        %v389 = vld [vmem:[%s269 + $0x8] sm:$0xff]
        %v390 = vld [vmem:[%s269 + $0x10] sm:$0xff]
        %v391 = vld [vmem:[%s269 + $0x18] sm:$0xff]
        %v392 = vld [vmem:[%s269 + $0x20] sm:$0xff]
        %v393 = vld [vmem:[%s269 + $0x28] sm:$0xff]
        %v394 = vld [vmem:[%s269 + $0x30] sm:$0xff]
        %v395 = vld [vmem:[%s269 + $0x38] sm:$0xff]
        %v396 = vld [vmem:[%s269 + $0x40] sm:$0xff]
        %v397 = vld [vmem:[%s269 + $0x48] sm:$0xff]
        %v398 = vld [vmem:[%s269 + $0x50] sm:$0xff]
        %v399 = vld [vmem:[%s269 + $0x58] sm:$0xff]
        %v400 = vld [vmem:[%s269 + $0x60] sm:$0xff]
        %v401 = vld [vmem:[%s269 + $0x68] sm:$0xff]
        %v402 = vld [vmem:[%s269 + $0x70] sm:$0xff]
        %v403 = vld [vmem:[%s269 + $0x78] sm:$0xff]
        %v420 = vunpack.c.l.b16 %v388
        %v421 = vunpack.c.h.b16 %v388
        %v422 = vunpack.c.l.b16 %v389
        %v423 = vunpack.c.h.b16 %v389
        %v424 = vunpack.c.l.b16 %v390
        %v425 = vunpack.c.h.b16 %v390
        %v426 = vunpack.c.l.b16 %v391
        %v427 = vunpack.c.h.b16 %v391
        %v428 = vunpack.c.l.b16 %v392
        %v429 = vunpack.c.h.b16 %v392
        %v430 = vunpack.c.l.b16 %v393
        %v431 = vunpack.c.h.b16 %v393
        %v432 = vunpack.c.l.b16 %v394
        %v433 = vunpack.c.h.b16 %v394
        %v434 = vunpack.c.l.b16 %v395
        %v435 = vunpack.c.h.b16 %v395
        %v436 = vunpack.c.l.b16 %v396
        %v437 = vunpack.c.h.b16 %v396
        %v438 = vunpack.c.l.b16 %v397
        %v439 = vunpack.c.h.b16 %v397
        %v440 = vunpack.c.l.b16 %v398
        %v441 = vunpack.c.h.b16 %v398
        %v442 = vunpack.c.l.b16 %v399
        %v443 = vunpack.c.h.b16 %v399
        %v444 = vunpack.c.l.b16 %v400
        %v445 = vunpack.c.h.b16 %v400
        %v446 = vunpack.c.l.b16 %v401
        %v447 = vunpack.c.h.b16 %v401
        %v448 = vunpack.c.l.b16 %v402
        %v449 = vunpack.c.h.b16 %v402
        %v450 = vunpack.c.l.b16 %v403
        %v451 = vunpack.c.h.b16 %v403
        %v452 = vpack.c.b16 %v422, %v420
        %v453 = vpack.c.b16 %v423, %v421
        %v454 = vpack.c.b16 %v426, %v424
        %v455 = vpack.c.b16 %v427, %v425
        %v456 = vpack.c.b16 %v430, %v428
        %v457 = vpack.c.b16 %v431, %v429
        %v458 = vpack.c.b16 %v434, %v432
        %v459 = vpack.c.b16 %v435, %v433
        %v460 = vpack.c.b16 %v438, %v436
        %v461 = vpack.c.b16 %v439, %v437
        %v462 = vpack.c.b16 %v442, %v440
        %v463 = vpack.c.b16 %v443, %v441
        %v464 = vpack.c.b16 %v446, %v444
        %v465 = vpack.c.b16 %v447, %v445
        %v466 = vpack.c.b16 %v450, %v448
        %v467 = vpack.c.b16 %v451, %v449
        %v516 = vunpack.c.l.b16 %v340
        %v517 = vunpack.c.l.b16 %v341
        %v518 = vunpack.c.l.b16 %v342
        %v519 = vunpack.c.l.b16 %v343
        %v520 = vunpack.c.l.b16 %v344
        %v521 = vunpack.c.l.b16 %v345
        %v522 = vunpack.c.l.b16 %v346
        %v523 = vunpack.c.l.b16 %v347
        %v524 = vunpack.c.l.b16 %v348
        %v525 = vunpack.c.l.b16 %v349
        %v526 = vunpack.c.l.b16 %v350
        %v527 = vunpack.c.l.b16 %v351
        %v528 = vunpack.c.l.b16 %v352
        %v529 = vunpack.c.l.b16 %v353
        %v530 = vunpack.c.l.b16 %v354
        %v531 = vunpack.c.l.b16 %v355
        %v532 = vunpack.c.l.b16 %v356
        %v533 = vunpack.c.l.b16 %v357
        %v534 = vunpack.c.l.b16 %v358
        %v535 = vunpack.c.l.b16 %v359
        %v536 = vunpack.c.l.b16 %v360
        %v537 = vunpack.c.l.b16 %v361
        %v538 = vunpack.c.l.b16 %v362
        %v539 = vunpack.c.l.b16 %v363
        %v540 = vunpack.c.l.b16 %v364
        %v541 = vunpack.c.l.b16 %v365
        %v542 = vunpack.c.l.b16 %v366
        %v543 = vunpack.c.l.b16 %v367
        %v544 = vunpack.c.l.b16 %v368
        %v545 = vunpack.c.l.b16 %v369
        %v546 = vunpack.c.l.b16 %v370
        %v547 = vunpack.c.l.b16 %v371
        %v548 = vpack.c.b16 %v517, %v516
        %v549 = vpack.c.b16 %v519, %v518
        %v550 = vpack.c.b16 %v521, %v520
        %v551 = vpack.c.b16 %v523, %v522
        %v552 = vpack.c.b16 %v525, %v524
        %v553 = vpack.c.b16 %v527, %v526
        %v554 = vpack.c.b16 %v529, %v528
        %v555 = vpack.c.b16 %v531, %v530
        %v556 = vpack.c.b16 %v533, %v532
        %v557 = vpack.c.b16 %v535, %v534
        %v558 = vpack.c.b16 %v537, %v536
        %v559 = vpack.c.b16 %v539, %v538
        %v560 = vpack.c.b16 %v541, %v540
        %v561 = vpack.c.b16 %v543, %v542
        %v562 = vpack.c.b16 %v545, %v544
        %v563 = vpack.c.b16 %v547, %v546
        %580 = vmatpush.bf16.msra.mxu0 %v555
        %581 = vmatpush.bf16.msra.mxu0 %v554
        %582 = vmatpush.bf16.msra.mxu0 %v553
        %583 = vmatpush.bf16.msra.mxu0 %v552
        %584 = vmatpush.bf16.msra.mxu0 %v551
        %585 = vmatpush.bf16.msra.mxu0 %v550
        %586 = vmatpush.bf16.msra.mxu0 %v549
        %587 = vmatpush.bf16.msra.mxu0 %v548
        %588 = vmatmul.bf16.gmra.mxu0 %v452
        %v589 = vpop.f32.mrf.mxu0
        %v590 = vadd.f32 0.0, %v589
        %v591 = vpop.f32.mrf.mxu0
        %v592 = vadd.f32 0.0, %v591
        %593 = vmatmul.bf16.gmra.mxu0 %v454
        %v594 = vpop.f32.mrf.mxu0
        %v595 = vadd.f32 0.0, %v594
        %v596 = vpop.f32.mrf.mxu0
        %v597 = vadd.f32 0.0, %v596
        %598 = vmatmul.bf16.gmra.mxu0 %v456
        %v599 = vpop.f32.mrf.mxu0
        %v600 = vadd.f32 0.0, %v599
        %v601 = vpop.f32.mrf.mxu0
        %v602 = vadd.f32 0.0, %v601
        %603 = vmatmul.bf16.gmra.mxu0 %v458
        %v604 = vpop.f32.mrf.mxu0
        %v605 = vadd.f32 0.0, %v604
        %v606 = vpop.f32.mrf.mxu0
        %v607 = vadd.f32 0.0, %v606
        %608 = vmatmul.bf16.gmra.mxu0 %v460
        %v609 = vpop.f32.mrf.mxu0
        %v610 = vadd.f32 0.0, %v609
        %v611 = vpop.f32.mrf.mxu0
        %v612 = vadd.f32 0.0, %v611
        %613 = vmatmul.bf16.gmra.mxu0 %v462
        %v614 = vpop.f32.mrf.mxu0
        %v615 = vadd.f32 0.0, %v614
        %v616 = vpop.f32.mrf.mxu0
        %v617 = vadd.f32 0.0, %v616
        %618 = vmatmul.bf16.gmra.mxu0 %v464
        %v619 = vpop.f32.mrf.mxu0
        %v620 = vadd.f32 0.0, %v619
        %v621 = vpop.f32.mrf.mxu0
        %v622 = vadd.f32 0.0, %v621
        %623 = vmatmul.bf16.gmra.mxu0 %v466
        %v624 = vpop.f32.mrf.mxu0
        %v625 = vadd.f32 0.0, %v624
        %v626 = vpop.f32.mrf.mxu0
        %v627 = vadd.f32 0.0, %v626
        %628 = vdwg.mxu0
        %629 = vmatpush.bf16.msra.mxu0 %v563
        %630 = vmatpush.bf16.msra.mxu0 %v562
        %631 = vmatpush.bf16.msra.mxu0 %v561
        %632 = vmatpush.bf16.msra.mxu0 %v560
        %633 = vmatpush.bf16.msra.mxu0 %v559
        %634 = vmatpush.bf16.msra.mxu0 %v558
        %635 = vmatpush.bf16.msra.mxu0 %v557
        %636 = vmatpush.bf16.msra.mxu0 %v556
        %637 = vmatmul.bf16.gmra.mxu0 %v453
        %v638 = vpop.f32.mrf.mxu0
        %v639 = vadd.f32 %v590, %v638
        %v640 = vpop.f32.mrf.mxu0
        %v641 = vadd.f32 %v592, %v640
        %642 = vmatmul.bf16.gmra.mxu0 %v455
        %v643 = vpop.f32.mrf.mxu0
        %v644 = vadd.f32 %v595, %v643
        %v645 = vpop.f32.mrf.mxu0
        %v646 = vadd.f32 %v597, %v645
        %647 = vmatmul.bf16.gmra.mxu0 %v457
        %v648 = vpop.f32.mrf.mxu0
        %v649 = vadd.f32 %v600, %v648
        %v650 = vpop.f32.mrf.mxu0
        %v651 = vadd.f32 %v602, %v650
        %652 = vmatmul.bf16.gmra.mxu0 %v459
        %v653 = vpop.f32.mrf.mxu0
        %v654 = vadd.f32 %v605, %v653
        %v655 = vpop.f32.mrf.mxu0
        %v656 = vadd.f32 %v607, %v655
        %657 = vmatmul.bf16.gmra.mxu0 %v461
        %v658 = vpop.f32.mrf.mxu0
        %v659 = vadd.f32 %v610, %v658
        %v660 = vpop.f32.mrf.mxu0
        %v661 = vadd.f32 %v612, %v660
        %662 = vmatmul.bf16.gmra.mxu0 %v463
        %v663 = vpop.f32.mrf.mxu0
        %v664 = vadd.f32 %v615, %v663
        %v665 = vpop.f32.mrf.mxu0
        %v666 = vadd.f32 %v617, %v665
        %667 = vmatmul.bf16.gmra.mxu0 %v465
        %v668 = vpop.f32.mrf.mxu0
        %v669 = vadd.f32 %v620, %v668
        %v670 = vpop.f32.mrf.mxu0
        %v671 = vadd.f32 %v622, %v670
        %672 = vmatmul.bf16.gmra.mxu0 %v467
        %v673 = vpop.f32.mrf.mxu0
        %v674 = vadd.f32 %v625, %v673
        %v675 = vpop.f32.mrf.mxu0
        %v676 = vadd.f32 %v627, %v675
        %677 = vdwg.mxu0
        %v678 = vadd.f32 %v372, %v639
        %v679 = vadd.f32 %v373, %v641
        %v680 = vadd.f32 %v374, %v644
        %v681 = vadd.f32 %v375, %v646
        %v682 = vadd.f32 %v376, %v649
        %v683 = vadd.f32 %v377, %v651
        %v684 = vadd.f32 %v378, %v654
        %v685 = vadd.f32 %v379, %v656
        %v686 = vadd.f32 %v380, %v659
        %v687 = vadd.f32 %v381, %v661
        %v688 = vadd.f32 %v382, %v664
        %v689 = vadd.f32 %v383, %v666
        %v690 = vadd.f32 %v384, %v669
        %v691 = vadd.f32 %v385, %v671
        %v692 = vadd.f32 %v386, %v674
        %v693 = vadd.f32 %v387, %v676
        %694 = vst [vmem:[#allocation2] sm:$0xff] %v678
        %695 = vst [vmem:[#allocation2 + $0x8] sm:$0xff] %v679
        %696 = vst [vmem:[#allocation2 + $0x10] sm:$0xff] %v680
        %697 = vst [vmem:[#allocation2 + $0x18] sm:$0xff] %v681
        %698 = vst [vmem:[#allocation2 + $0x20] sm:$0xff] %v682
        %699 = vst [vmem:[#allocation2 + $0x28] sm:$0xff] %v683
        %700 = vst [vmem:[#allocation2 + $0x30] sm:$0xff] %v684
        %701 = vst [vmem:[#allocation2 + $0x38] sm:$0xff] %v685
        %702 = vst [vmem:[#allocation2 + $0x40] sm:$0xff] %v686
        %703 = vst [vmem:[#allocation2 + $0x48] sm:$0xff] %v687
        %704 = vst [vmem:[#allocation2 + $0x50] sm:$0xff] %v688
        %705 = vst [vmem:[#allocation2 + $0x58] sm:$0xff] %v689
        %706 = vst [vmem:[#allocation2 + $0x60] sm:$0xff] %v690
        %707 = vst [vmem:[#allocation2 + $0x68] sm:$0xff] %v691
        %708 = vst [vmem:[#allocation2 + $0x70] sm:$0xff] %v692
        %709 = vst [vmem:[#allocation2 + $0x78] sm:$0xff] %v693
        %p710 = scmp.eq.s32.totalorder %s29, 1
        // Predicated region
        $region61: #{tpu_custom_call.1} parent=39 // pred_check
          %p711 = pneg %p710
        $region62: #{tpu_custom_call.1} parent=39 // pred_check_branch
          %713 = sbr.rel (%p711) target = $region64
        $region63: #{tpu_custom_call.1} parent=39 // pred_region
          %s714 = smul.u32 %s28, 128
          %s715 = sshra.s32 %s714, 3
          %s716 = sand.u32 %s714, 7
          %s717 = smul.addr %s715, 4
          %s718 = scalar_lea.vmem [#allocation6], %s717
          %v719 = vld [vmem:[%s718] sm:$0xf]
          %v720 = vld [vmem:[%s718 + $0x4] sm:$0xf]
          %v721 = vld [vmem:[%s718 + $0x8] sm:$0xf]
          %v722 = vld [vmem:[%s718 + $0xc] sm:$0xf]
          %v723 = vld [vmem:[%s718 + $0x10] sm:$0xf]
          %v724 = vld [vmem:[%s718 + $0x14] sm:$0xf]
          %v725 = vld [vmem:[%s718 + $0x18] sm:$0xf]
          %v726 = vld [vmem:[%s718 + $0x1c] sm:$0xf]
          %v727 = vld [vmem:[%s718 + $0x20] sm:$0xf]
          %v728 = vld [vmem:[%s718 + $0x24] sm:$0xf]
          %v729 = vld [vmem:[%s718 + $0x28] sm:$0xf]
          %v730 = vld [vmem:[%s718 + $0x2c] sm:$0xf]
          %v731 = vld [vmem:[%s718 + $0x30] sm:$0xf]
          %v732 = vld [vmem:[%s718 + $0x34] sm:$0xf]
          %v733 = vld [vmem:[%s718 + $0x38] sm:$0xf]
          %v734 = vld [vmem:[%s718 + $0x3c] sm:$0xf]
          %v735 = vld [vmem:[#allocation2] sm:$0xff]
          %v736 = vld [vmem:[#allocation2 + $0x8] sm:$0xff]
          %v737 = vld [vmem:[#allocation2 + $0x10] sm:$0xff]
          %v738 = vld [vmem:[#allocation2 + $0x18] sm:$0xff]
          %v739 = vld [vmem:[#allocation2 + $0x20] sm:$0xff]
          %v740 = vld [vmem:[#allocation2 + $0x28] sm:$0xff]
          %v741 = vld [vmem:[#allocation2 + $0x30] sm:$0xff]
          %v742 = vld [vmem:[#allocation2 + $0x38] sm:$0xff]
          %v743 = vld [vmem:[#allocation2 + $0x40] sm:$0xff]
          %v744 = vld [vmem:[#allocation2 + $0x48] sm:$0xff]
          %v745 = vld [vmem:[#allocation2 + $0x50] sm:$0xff]
          %v746 = vld [vmem:[#allocation2 + $0x58] sm:$0xff]
          %v747 = vld [vmem:[#allocation2 + $0x60] sm:$0xff]
          %v748 = vld [vmem:[#allocation2 + $0x68] sm:$0xff]
          %v749 = vld [vmem:[#allocation2 + $0x70] sm:$0xff]
          %v750 = vld [vmem:[#allocation2 + $0x78] sm:$0xff]
          %v751 = vpack.c.bf16 %v736, %v735
          %v752 = vpack.c.bf16 %v738, %v737
          %v753 = vpack.c.bf16 %v740, %v739
          %v754 = vpack.c.bf16 %v742, %v741
          %v755 = vpack.c.bf16 %v744, %v743
          %v756 = vpack.c.bf16 %v746, %v745
          %v757 = vpack.c.bf16 %v748, %v747
          %v758 = vpack.c.bf16 %v750, %v749
          %v759 = vld [vmem:[#allocation8] sm:$0xf]
          %v760 = vld [vmem:[#allocation8 + $0x4] sm:$0xf]
          %v761 = vld [vmem:[#allocation8 + $0x8] sm:$0xf]
          %v762 = vld [vmem:[#allocation8 + $0xc] sm:$0xf]
          %v763 = vld [vmem:[#allocation8 + $0x10] sm:$0xf]
          %v764 = vld [vmem:[#allocation8 + $0x14] sm:$0xf]
          %v765 = vld [vmem:[#allocation8 + $0x18] sm:$0xf]
          %v766 = vld [vmem:[#allocation8 + $0x1c] sm:$0xf]
          %v767 = vld [vmem:[#allocation8 + $0x20] sm:$0xf]
          %v768 = vld [vmem:[#allocation8 + $0x24] sm:$0xf]
          %v769 = vld [vmem:[#allocation8 + $0x28] sm:$0xf]
          %v770 = vld [vmem:[#allocation8 + $0x2c] sm:$0xf]
          %v771 = vld [vmem:[#allocation8 + $0x30] sm:$0xf]
          %v772 = vld [vmem:[#allocation8 + $0x34] sm:$0xf]
          %v773 = vld [vmem:[#allocation8 + $0x38] sm:$0xf]
          %v774 = vld [vmem:[#allocation8 + $0x3c] sm:$0xf]
          %v775 = vld [vmem:[#allocation9] sm:$0xf]
          %v776 = vld [vmem:[#allocation9 + $0x4] sm:$0xf]
          %v777 = vld [vmem:[#allocation9 + $0x8] sm:$0xf]
          %v778 = vld [vmem:[#allocation9 + $0xc] sm:$0xf]
          %v779 = vld [vmem:[#allocation9 + $0x10] sm:$0xf]
          %v780 = vld [vmem:[#allocation9 + $0x14] sm:$0xf]
          %v781 = vld [vmem:[#allocation9 + $0x18] sm:$0xf]
          %v782 = vld [vmem:[#allocation9 + $0x1c] sm:$0xf]
          %v783 = vld [vmem:[#allocation9 + $0x20] sm:$0xf]
          %v784 = vld [vmem:[#allocation9 + $0x24] sm:$0xf]
          %v785 = vld [vmem:[#allocation9 + $0x28] sm:$0xf]
          %v786 = vld [vmem:[#allocation9 + $0x2c] sm:$0xf]
          %v787 = vld [vmem:[#allocation9 + $0x30] sm:$0xf]
          %v788 = vld [vmem:[#allocation9 + $0x34] sm:$0xf]
          %v789 = vld [vmem:[#allocation9 + $0x38] sm:$0xf]
          %v790 = vld [vmem:[#allocation9 + $0x3c] sm:$0xf]
          %v807 = vunpack.c.l.b16 %v719
          %v808 = vunpack.c.l.b16 %v720
          %v809 = vunpack.c.l.b16 %v721
          %v810 = vunpack.c.l.b16 %v722
          %v811 = vunpack.c.l.b16 %v723
          %v812 = vunpack.c.l.b16 %v724
          %v813 = vunpack.c.l.b16 %v725
          %v814 = vunpack.c.l.b16 %v726
          %v815 = vunpack.c.l.b16 %v727
          %v816 = vunpack.c.l.b16 %v728
          %v817 = vunpack.c.l.b16 %v729
          %v818 = vunpack.c.l.b16 %v730
          %v819 = vunpack.c.l.b16 %v731
          %v820 = vunpack.c.l.b16 %v732
          %v821 = vunpack.c.l.b16 %v733
          %v822 = vunpack.c.l.b16 %v734
          %v823 = vpack.c.b16 %v808, %v807
          %v824 = vpack.c.b16 %v810, %v809
          %v825 = vpack.c.b16 %v812, %v811
          %v826 = vpack.c.b16 %v814, %v813
          %v827 = vpack.c.b16 %v816, %v815
          %v828 = vpack.c.b16 %v818, %v817
          %v829 = vpack.c.b16 %v820, %v819
          %v830 = vpack.c.b16 %v822, %v821
          %v855 = vunpack.c.l.b16 %v775
          %v856 = vunpack.c.l.b16 %v776
          %v857 = vunpack.c.l.b16 %v777
          %v858 = vunpack.c.l.b16 %v778
          %v859 = vunpack.c.l.b16 %v779
          %v860 = vunpack.c.l.b16 %v780
          %v861 = vunpack.c.l.b16 %v781
          %v862 = vunpack.c.l.b16 %v782
          %v863 = vunpack.c.l.b16 %v783
          %v864 = vunpack.c.l.b16 %v784
          %v865 = vunpack.c.l.b16 %v785
          %v866 = vunpack.c.l.b16 %v786
          %v867 = vunpack.c.l.b16 %v787
          %v868 = vunpack.c.l.b16 %v788
          %v869 = vunpack.c.l.b16 %v789
          %v870 = vunpack.c.l.b16 %v790
          %v871 = vpack.c.b16 %v856, %v855
          %v872 = vpack.c.b16 %v858, %v857
          %v873 = vpack.c.b16 %v860, %v859
          %v874 = vpack.c.b16 %v862, %v861
          %v875 = vpack.c.b16 %v864, %v863
          %v876 = vpack.c.b16 %v866, %v865
          %v877 = vpack.c.b16 %v868, %v867
          %v878 = vpack.c.b16 %v870, %v869
          %887 = vmatpush.bf16.msra.mxu0 %v878
          %888 = vmatpush.bf16.msra.mxu0 %v877
          %889 = vmatpush.bf16.msra.mxu0 %v876
          %890 = vmatpush.bf16.msra.mxu0 %v875
          %891 = vmatpush.bf16.msra.mxu0 %v874
          %892 = vmatpush.bf16.msra.mxu0 %v873
          %893 = vmatpush.bf16.msra.mxu0 %v872
          %894 = vmatpush.bf16.msra.mxu0 %v871
          %895 = vmatmul.bf16.gmra.mxu0 %v823
          %v896 = vpop.f32.mrf.mxu0
          %v897 = vadd.f32 0.0, %v896
          %v898 = vpop.f32.mrf.mxu0
          %v899 = vadd.f32 0.0, %v898
          %900 = vmatmul.bf16.gmra.mxu0 %v824
          %v901 = vpop.f32.mrf.mxu0
          %v902 = vadd.f32 0.0, %v901
          %v903 = vpop.f32.mrf.mxu0
          %v904 = vadd.f32 0.0, %v903
          %905 = vmatmul.bf16.gmra.mxu0 %v825
          %v906 = vpop.f32.mrf.mxu0
          %v907 = vadd.f32 0.0, %v906
          %v908 = vpop.f32.mrf.mxu0
          %v909 = vadd.f32 0.0, %v908
          %910 = vmatmul.bf16.gmra.mxu0 %v826
          %v911 = vpop.f32.mrf.mxu0
          %v912 = vadd.f32 0.0, %v911
          %v913 = vpop.f32.mrf.mxu0
          %v914 = vadd.f32 0.0, %v913
          %915 = vmatmul.bf16.gmra.mxu0 %v827
          %v916 = vpop.f32.mrf.mxu0
          %v917 = vadd.f32 0.0, %v916
          %v918 = vpop.f32.mrf.mxu0
          %v919 = vadd.f32 0.0, %v918
          %920 = vmatmul.bf16.gmra.mxu0 %v828
          %v921 = vpop.f32.mrf.mxu0
          %v922 = vadd.f32 0.0, %v921
          %v923 = vpop.f32.mrf.mxu0
          %v924 = vadd.f32 0.0, %v923
          %925 = vmatmul.bf16.gmra.mxu0 %v829
          %v926 = vpop.f32.mrf.mxu0
          %v927 = vadd.f32 0.0, %v926
          %v928 = vpop.f32.mrf.mxu0
          %v929 = vadd.f32 0.0, %v928
          %930 = vmatmul.bf16.gmra.mxu0 %v830
          %v931 = vpop.f32.mrf.mxu0
          %v932 = vadd.f32 0.0, %v931
          %v933 = vpop.f32.mrf.mxu0
          %v934 = vadd.f32 0.0, %v933
          %935 = vdwg.mxu0
          %v952 = vunpack.c.l.b16 %v759
          %v953 = vunpack.c.l.b16 %v760
          %v954 = vunpack.c.l.b16 %v761
          %v955 = vunpack.c.l.b16 %v762
          %v956 = vunpack.c.l.b16 %v763
          %v957 = vunpack.c.l.b16 %v764
          %v958 = vunpack.c.l.b16 %v765
          %v959 = vunpack.c.l.b16 %v766
          %v960 = vunpack.c.l.b16 %v767
          %v961 = vunpack.c.l.b16 %v768
          %v962 = vunpack.c.l.b16 %v769
          %v963 = vunpack.c.l.b16 %v770
          %v964 = vunpack.c.l.b16 %v771
          %v965 = vunpack.c.l.b16 %v772
          %v966 = vunpack.c.l.b16 %v773
          %v967 = vunpack.c.l.b16 %v774
          %v968 = vpack.c.b16 %v953, %v952
          %v969 = vpack.c.b16 %v955, %v954
          %v970 = vpack.c.b16 %v957, %v956
          %v971 = vpack.c.b16 %v959, %v958
          %v972 = vpack.c.b16 %v961, %v960
          %v973 = vpack.c.b16 %v963, %v962
          %v974 = vpack.c.b16 %v965, %v964
          %v975 = vpack.c.b16 %v967, %v966
          %984 = vmatpush.bf16.msra.mxu0 %v975
          %985 = vmatpush.bf16.msra.mxu0 %v974
          %986 = vmatpush.bf16.msra.mxu0 %v973
          %987 = vmatpush.bf16.msra.mxu0 %v972
          %988 = vmatpush.bf16.msra.mxu0 %v971
          %989 = vmatpush.bf16.msra.mxu0 %v970
          %990 = vmatpush.bf16.msra.mxu0 %v969
          %991 = vmatpush.bf16.msra.mxu0 %v968
          %992 = vmatmul.bf16.gmra.mxu0 %v751
          %v993 = vpop.f32.mrf.mxu0
          %v994 = vadd.f32 %v897, %v993
          %v995 = vpop.f32.mrf.mxu0
          %v996 = vadd.f32 %v899, %v995
          %997 = vmatmul.bf16.gmra.mxu0 %v752
          %v998 = vpop.f32.mrf.mxu0
          %v999 = vadd.f32 %v902, %v998
          %v1000 = vpop.f32.mrf.mxu0
          %v1001 = vadd.f32 %v904, %v1000
          %1002 = vmatmul.bf16.gmra.mxu0 %v753
          %v1003 = vpop.f32.mrf.mxu0
          %v1004 = vadd.f32 %v907, %v1003
          %v1005 = vpop.f32.mrf.mxu0
          %v1006 = vadd.f32 %v909, %v1005
          %1007 = vmatmul.bf16.gmra.mxu0 %v754
          %v1008 = vpop.f32.mrf.mxu0
          %v1009 = vadd.f32 %v912, %v1008
          %v1010 = vpop.f32.mrf.mxu0
          %v1011 = vadd.f32 %v914, %v1010
          %1012 = vmatmul.bf16.gmra.mxu0 %v755
          %v1013 = vpop.f32.mrf.mxu0
          %v1014 = vadd.f32 %v917, %v1013
          %v1015 = vpop.f32.mrf.mxu0
          %v1016 = vadd.f32 %v919, %v1015
          %1017 = vmatmul.bf16.gmra.mxu0 %v756
          %v1018 = vpop.f32.mrf.mxu0
          %v1019 = vadd.f32 %v922, %v1018
          %v1020 = vpop.f32.mrf.mxu0
          %v1021 = vadd.f32 %v924, %v1020
          %1022 = vmatmul.bf16.gmra.mxu0 %v757
          %v1023 = vpop.f32.mrf.mxu0
          %v1024 = vadd.f32 %v927, %v1023
          %v1025 = vpop.f32.mrf.mxu0
          %v1026 = vadd.f32 %v929, %v1025
          %1027 = vmatmul.bf16.gmra.mxu0 %v758
          %v1028 = vpop.f32.mrf.mxu0
          %v1029 = vadd.f32 %v932, %v1028
          %v1030 = vpop.f32.mrf.mxu0
          %v1031 = vadd.f32 %v934, %v1030
          %1032 = vdwg.mxu0
          %v1033 = vld [vmem:[%s4] sm:$0x1]
          %v1035 = vperm.slane %v1033, 0
          %v1037 = vadd.f32 %v994, %v1035
          %v1038 = vadd.f32 %v996, %v1035
          %v1039 = vadd.f32 %v999, %v1035
          %v1040 = vadd.f32 %v1001, %v1035
          %v1041 = vadd.f32 %v1004, %v1035
          %v1042 = vadd.f32 %v1006, %v1035
          %v1043 = vadd.f32 %v1009, %v1035
          %v1044 = vadd.f32 %v1011, %v1035
          %v1045 = vadd.f32 %v1014, %v1035
          %v1046 = vadd.f32 %v1016, %v1035
          %v1047 = vadd.f32 %v1019, %v1035
          %v1048 = vadd.f32 %v1021, %v1035
          %v1049 = vadd.f32 %v1024, %v1035
          %v1050 = vadd.f32 %v1026, %v1035
          %v1051 = vadd.f32 %v1029, %v1035
          %v1052 = vadd.f32 %v1031, %v1035
          %v1053 = vmax.f32 %v1037, 0.0
          %v1054 = vmax.f32 %v1038, 0.0
          %v1055 = vmax.f32 %v1039, 0.0
          %v1056 = vmax.f32 %v1040, 0.0
          %v1057 = vmax.f32 %v1041, 0.0
          %v1058 = vmax.f32 %v1042, 0.0
          %v1059 = vmax.f32 %v1043, 0.0
          %v1060 = vmax.f32 %v1044, 0.0
          %v1061 = vmax.f32 %v1045, 0.0
          %v1062 = vmax.f32 %v1046, 0.0
          %v1063 = vmax.f32 %v1047, 0.0
          %v1064 = vmax.f32 %v1048, 0.0
          %v1065 = vmax.f32 %v1049, 0.0
          %v1066 = vmax.f32 %v1050, 0.0
          %v1067 = vmax.f32 %v1051, 0.0
          %v1068 = vmax.f32 %v1052, 0.0
          %v1069 = vpack.c.bf16 %v1053, %v1053
          %v1070 = vpack.c.bf16 %v1054, %v1054
          %v1071 = vpack.c.bf16 %v1055, %v1055
          %v1072 = vpack.c.bf16 %v1056, %v1056
          %v1073 = vpack.c.bf16 %v1057, %v1057
          %v1074 = vpack.c.bf16 %v1058, %v1058
          %v1075 = vpack.c.bf16 %v1059, %v1059
          %v1076 = vpack.c.bf16 %v1060, %v1060
          %v1077 = vpack.c.bf16 %v1061, %v1061
          %v1078 = vpack.c.bf16 %v1062, %v1062
          %v1079 = vpack.c.bf16 %v1063, %v1063
          %v1080 = vpack.c.bf16 %v1064, %v1064
          %v1081 = vpack.c.bf16 %v1065, %v1065
          %v1082 = vpack.c.bf16 %v1066, %v1066
          %v1083 = vpack.c.bf16 %v1067, %v1067
          %v1084 = vpack.c.bf16 %v1068, %v1068
          %1085 = vst [vmem:[%s311] sm:$0xf] %v1069
          %1086 = vst [vmem:[%s311 + $0x4] sm:$0xf] %v1070
          %1087 = vst [vmem:[%s311 + $0x8] sm:$0xf] %v1071
          %1088 = vst [vmem:[%s311 + $0xc] sm:$0xf] %v1072
          %1089 = vst [vmem:[%s311 + $0x10] sm:$0xf] %v1073
          %1090 = vst [vmem:[%s311 + $0x14] sm:$0xf] %v1074
          %1091 = vst [vmem:[%s311 + $0x18] sm:$0xf] %v1075
          %1092 = vst [vmem:[%s311 + $0x1c] sm:$0xf] %v1076
          %1093 = vst [vmem:[%s311 + $0x20] sm:$0xf] %v1077
          %1094 = vst [vmem:[%s311 + $0x24] sm:$0xf] %v1078
          %1095 = vst [vmem:[%s311 + $0x28] sm:$0xf] %v1079
          %1096 = vst [vmem:[%s311 + $0x2c] sm:$0xf] %v1080
          %1097 = vst [vmem:[%s311 + $0x30] sm:$0xf] %v1081
          %1098 = vst [vmem:[%s311 + $0x34] sm:$0xf] %v1082
          %1099 = vst [vmem:[%s311 + $0x38] sm:$0xf] %v1083
          %1100 = vst [vmem:[%s311 + $0x3c] sm:$0xf] %v1084
        $region64: #{tpu_custom_call.1} parent=39 // pred_fallthru
          _
        %s1101 = sand.u32 %s156, 1
        %s1102 = scalar_lea.sflag [#allocation5], %s1101
        %s1103 = sand.u32 %s156, 1
        %s1104 = smul.addr %s1103, 64
        %s1105 = scalar_lea.vmem [#allocation11], %s1104
        // Predicated region
        $region65: #{tpu_custom_call.1} parent=39 // pred_check
          %p1106 = pneg %p166
        $region66: #{tpu_custom_call.1} parent=39 // pred_check_branch
          %1108 = sbr.rel (%p1106) target = $region68
        $region67: #{tpu_custom_call.1} parent=39 // pred_region
          %s1109 = smul.u32 16, %s28
          %1111 = vsyncadd %s1102, 0
          %s1112 = smul.addr %s1109, 4
          %s1113 = scalar_lea.hbm %s5, %s1112
          %s1114 = sshll.u32 %s1105, 4
          %s1115 = int_to_ptr.vmem [resolvable:$true] %s1114
          %s1116 = sshll.u32 %s1113, 4
          %s1117 = int_to_ptr.hbm [resolvable:$true] %s1116
          %1122 = dma.vmem_to_hbm [thread:$0]  %s1115, 1024, %s1117, %s1102, 64, 64, 4
        $region68: #{tpu_custom_call.1} parent=39 // pred_fallthru
          _
      $region40: #{tpu_custom_call.1} parent=5 // pred_fallthru
        _
      %p1123 = scmp.le.s32.totalorder 2, %s19
      // Predicated region
      $region69: #{tpu_custom_call.1} parent=5 // pred_check
        %p1124 = pneg %p1123
      $region70: #{tpu_custom_call.1} parent=5 // pred_check_branch
        %1126 = sbr.rel (%p1124) target = $region72
      $region71: #{tpu_custom_call.1} parent=5 // pred_region
        %s1127 = ssub.s32 %s19, 2
        // Predicated region
        $region73: #{tpu_custom_call.1} parent=71 // pred_check
          %p1128 = pneg %p172
        $region74: #{tpu_custom_call.1} parent=71 // pred_check_branch
          %1130 = sbr.rel (%p1128) target = $region76
        $region75: #{tpu_custom_call.1} parent=71 // pred_region
          %s1131 = sand.u32 %s157, 1
          %s1132 = scalar_lea.sflag [#allocation5], %s1131
          %s1133 = sand.u32 %s157, 1
          %s1134 = smul.addr %s1133, 64
          %s1135 = scalar_lea.vmem [#allocation11], %s1134
          %1137 = dma.done %s1132, 1024
        $region76: #{tpu_custom_call.1} parent=71 // pred_fallthru
          _
      $region72: #{tpu_custom_call.1} parent=5 // pred_fallthru
        _
    $region6: #{tpu_custom_call.1} parent=1 // loop_footer
      %s23 = sadd.s32 1, %s19
    $region7: #{tpu_custom_call.1} parent=1 // loop_footer_branch
      %18 = sbr.rel target = $region3
    $region8: #{tpu_custom_call.1} parent=1 // loop_exit
      _
    %1138 = vsyncpa [#allocation4], 1
    %s1139 = scalar_lea.sflag [#allocation4], 1
    %1140 = vsyncpa %s1139, 1
    %1141 = vsyncpa [#allocation7], 1
    %1142 = vsyncpa [#allocation10], 1
    %1143 = vsyncpa [#allocation5], 1
    %s1144 = scalar_lea.sflag [#allocation5], 1
    %1145 = vsyncpa %s1144, 1

</llo_original>
